<compile_context>
chip_gen: v5e
topology: v5e:2x2
jax: 0.10.0
libtpu: 0.0.40
codegen_flags: <defaults>
</compile_context>

<pallas_src>
import functools

import jax
import jax.numpy as jnp
from jax import lax
from jax.experimental import pallas as pl
from jax.experimental.pallas import tpu as pltpu

_EPS = 1e-7
_LANES = 128
_DEFAULT_TILE_ROWS = 2048          # (2048, 128) f32 tile = 1 MiB per pipeline buffer


def _sublane_align(dtype):
    """Minimum sublane multiple for a dtype (8 for f32, 16 for bf16, 32 for 8-bit)."""
    return {4: 8, 2: 16, 1: 32}.get(jnp.dtype(dtype).itemsize, 8)


def _lane_slab(x):
    """Flatten x into a lane-dense (rows, 128) slab.

    The reshape is free (contiguous -> contiguous) when x.size % 128 == 0;
    otherwise only the final partial lane-row (< 128 elements) is padded.
    Padded elements are masked inside the kernel, so the pad value is irrelevant.
    Returns (slab, n_valid_elements, rows).
    """
    flat = x.reshape(-1)
    n = flat.shape[0]
    rows = max(pl.cdiv(n, _LANES), 1)
    pad = rows * _LANES - n
    if pad:
        flat = jnp.pad(flat, (0, pad))
    return flat.reshape(rows, _LANES), n, rows


def _disc_loss_kernel(d_self_ref, d_other_ref, out_ref, self_acc_ref, other_acc_ref,
                      *, tile_rows, blocks_per_core, n_self, n_other, w_other,
                      self_needs_mask):
    c = pl.program_id(0)                     # TensorCore split ("parallel")
    i = pl.program_id(1)                     # d_other tiles for this core ("arbitrary")
    last = pl.num_programs(1) - 1
    tile_elems = tile_rows * _LANES

    @pl.when(i == 0)
    def _():
        self_acc_ref[...] = jnp.zeros_like(self_acc_ref)
        other_acc_ref[...] = jnp.zeros_like(other_acc_ref)

    # d_self contribution: single resident block, consumed once, by core 0 only.
    @pl.when(jnp.logical_and(i == 0, c == 0))
    def _():
        xs = d_self_ref[...].astype(jnp.float32)
        if self_needs_mask:
            gidx = (lax.broadcasted_iota(jnp.int32, xs.shape, 0) * _LANES
                    + lax.broadcasted_iota(jnp.int32, xs.shape, 1))
            valid = gidx < n_self
            ys = jnp.where(valid, jnp.log(jnp.where(valid, xs, 1.0) + _EPS), 0.0)
        else:
            ys = jnp.log(xs + _EPS)
        self_acc_ref[...] = jnp.sum(ys, axis=0, keepdims=True)         # (1, 128)

    # d_other tile: log on the EUP, sublane-reduce into a lane-dense accumulator.
    x = d_other_ref[...].astype(jnp.float32)
    blk = c * blocks_per_core + i             # un-clamped logical block index
    start = blk * tile_elems                  # first flat element of this tile
    tile_fully_valid = start + tile_elems <= n_other

    @pl.when(tile_fully_valid)                # fast path: interior tiles, no mask
    def _():
        y = jnp.log(x + _EPS)
        other_acc_ref[...] += jnp.sum(y, axis=0, keepdims=True)

    @pl.when(jnp.logical_not(tile_fully_valid))   # trailing / out-of-range tile
    def _():
        gidx = (start
                + lax.broadcasted_iota(jnp.int32, x.shape, 0) * _LANES
                + lax.broadcasted_iota(jnp.int32, x.shape, 1))
        valid = gidx < n_other
        xm = jnp.where(valid, x, 1.0)                    # keep log() finite
        y = jnp.where(valid, jnp.log(xm + _EPS), 0.0)    # exact zero contribution
        other_acc_ref[...] += jnp.sum(y, axis=0, keepdims=True)

    @pl.when(i == last)
    def _():
        other_lane = jnp.sum(other_acc_ref[...], axis=0, keepdims=True)   # (1, 128)
        out_ref[0] = self_acc_ref[...] + w_other * other_lane


def discriminator_loss(d_self, d_other, *, max_tile_rows=_DEFAULT_TILE_ROWS,
                       min_pallas_elements=0):
    """d_self: (B, 1), d_other: (B, K-1). Returns the scalar loss as float32.

    For very small problems (below ~one tile of work) the standalone kernel is
    launch/DMA-overhead bound; callers may set `min_pallas_elements` to fall
    back to the fused pure-JAX path in that regime.
    """
    B = d_self.shape[0]
    km1 = d_other.shape[1]
    if B * km1 + B < min_pallas_elements:
        return discriminator_loss_ref(d_self, d_other).astype(jnp.float32)

    other_slab, n_other, rows_other = _lane_slab(d_other)
    self_slab, n_self, rows_self = _lane_slab(d_self)

    # Tile selection: full-extent single block when it fits (always legal),
    # otherwise the largest dtype-aligned tile <= max_tile_rows with a partial
    # (in-kernel masked) trailing block.
    align = _sublane_align(d_other.dtype)
    if rows_other <= max_tile_rows:
        tile_rows = rows_other
    else:
        tile_rows = max(align, (max_tile_rows // align) * align)
    n_blocks = pl.cdiv(rows_other, tile_rows)

    # Split d_other blocks over the two v7x TensorCores when there is enough
    # work; pure serial no-op on 1-TC chips (v5e/v6e).
    n_cores = 2 if n_blocks > 1 else 1
    blocks_per_core = pl.cdiv(n_blocks, n_cores)
    last_block = n_blocks - 1

    kernel = functools.partial(
        _disc_loss_kernel,
        tile_rows=tile_rows,
        blocks_per_core=blocks_per_core,
        n_self=n_self,
        n_other=n_other,
        w_other=1.0 / km1,                              # torch.div(1, K-1)
        self_needs_mask=(n_self != rows_self * _LANES),
    )

    cost = pl.CostEstimate(
        flops=2 * (n_other + n_self),
        transcendentals=n_other + n_self,
        bytes_accessed=(other_slab.size * other_slab.dtype.itemsize
                        + self_slab.size * self_slab.dtype.itemsize
                        + n_cores * _LANES * 4),
    )

    out = pl.pallas_call(
        kernel,
        out_shape=jax.ShapeDtypeStruct((n_cores, 1, _LANES), jnp.float32),
        grid_spec=pltpu.PrefetchScalarGridSpec(
            num_scalar_prefetch=0,
            grid=(n_cores, blocks_per_core),
            in_specs=[
                # d_self: small resident block (constant index).
                pl.BlockSpec((rows_self, _LANES), lambda c, i: (0, 0)),
                # d_other: pipelined tiles; block index clamped so the tail core
                # never issues an out-of-bounds DMA (its extra tile is masked).
                pl.BlockSpec(
                    (tile_rows, _LANES),
                    lambda c, i: (jnp.minimum(c * blocks_per_core + i, last_block), 0)),
            ],
            out_specs=pl.BlockSpec((1, 1, _LANES), lambda c, i: (c, 0, 0)),
            scratch_shapes=[
                pltpu.VMEM((1, _LANES), jnp.float32),   # self accumulator
                pltpu.VMEM((1, _LANES), jnp.float32),   # other accumulator
            ],
        ),
        compiler_params=pltpu.CompilerParams(
            dimension_semantics=("parallel", "arbitrary")),
        cost_estimate=cost,
    )(self_slab, other_slab)

    # Tiny finalize (<= 256 floats): combine per-core partials, scale by 1/B.
    return -jnp.sum(out) / B


def discriminator_loss_ref(d_self, d_other):
    eps = 1e-7
    km1 = d_other.shape[1]
    loss = -jnp.log(d_self + eps) - (1.0 / km1) * jnp.sum(
        jnp.log(d_other + eps), axis=1, keepdims=True)
    return jnp.sum(loss) / loss.shape[0]


if __name__ == "__main__":
    key = jax.random.PRNGKey(0)
    k1, k2, k3, k4 = jax.random.split(key, 4)

    # Case 1: the module's natural toy size (B=8, K=5 -> 4 "other" clients).
    batch, num_group_clients = 8, 5
    d_self = jax.nn.sigmoid(jax.random.normal(k1, (batch, 1), dtype=jnp.float32))
    d_other = jax.nn.sigmoid(
        jax.random.normal(k2, (batch, num_group_clients - 1), dtype=jnp.float32))
    out = jax.block_until_ready(discriminator_loss(d_self, d_other))
    ref = discriminator_loss_ref(d_self, d_other)
    assert jnp.allclose(out, ref, rtol=1e-5, atol=1e-5), (out, ref)

    # Case 2: larger, unaligned size with a tiny tile so the multi-block path,
    # the partial masked trailing tile, the clamped out-of-range block on the
    # second core and the 2-way parallel split are all exercised.
    batch2, km1_2 = 300, 7
    d_self2 = jax.nn.sigmoid(jax.random.normal(k3, (batch2, 1), dtype=jnp.float32))
    d_other2 = jax.nn.sigmoid(jax.random.normal(k4, (batch2, km1_2), dtype=jnp.float32))
    out2 = jax.block_until_ready(
        discriminator_loss(d_self2, d_other2, max_tile_rows=8))
    ref2 = discriminator_loss_ref(d_self2, d_other2)
    assert jnp.allclose(out2, ref2, rtol=1e-5, atol=1e-5), (out2, ref2)

    print("KERNEL_OK")
</pallas_src>

<mosaic_0001>
module attributes {stable_mosaic.version = 11 : i64} {
  func.func @_disc_loss_kernel(%arg0: i32, %arg1: i32, %arg2: memref<1x128xf32, #tpu.memory_space<vmem>>, %arg3: memref<1x128xf32, #tpu.memory_space<vmem>>, %arg4: memref<1x1x128xf32, #tpu.memory_space<vmem>>, %arg5: memref<1x128xf32, #tpu.memory_space<vmem>>, %arg6: memref<1x128xf32, #tpu.memory_space<vmem>>) attributes {dimension_semantics = [#tpu.dimension_semantics<parallel>, #tpu.dimension_semantics<arbitrary>], iteration_bounds = array<i64: 1, 1>, scalar_prefetch = 0 : i64, scratch_operands = 2 : i64, tpu.core_type = #tpu.core_type<tc>, window_params = [{pipeline_mode = #tpu.pipeline_mode<synchronous>, transform_indices = @transform_0, window_bounds = array<i64: 1, 128>}, {transform_indices = @transform_1, window_bounds = array<i64: 1, 128>}, {transform_indices = @transform_2, window_bounds = array<i64: 1, 1, 128>}]} {
    %c0_i32 = arith.constant 0 : i32
    %0 = arith.cmpi eq, %arg1, %c0_i32 : i32
    %1 = arith.extui %0 : i1 to i32
    %c0_i32_0 = arith.constant 0 : i32
    %2 = arith.cmpi ne, %1, %c0_i32_0 : i32
    scf.if %2 {
      %cst = arith.constant 0.000000e+00 : f32
      %22 = vector.broadcast %cst : f32 to vector<1x128xf32>
      %c0_10 = arith.constant 0 : index
      %c0_11 = arith.constant 0 : index
      %23 = vector.load %arg5[%c0_10, %c0_11] : memref<1x128xf32, #tpu.memory_space<vmem>>, vector<1x128xf32>
      tpu.vector_store %arg5[%c0_10, %c0_11], %22 {strides = array<i32>} : memref<1x128xf32, #tpu.memory_space<vmem>>, vector<1x128xf32>,
      %cst_12 = arith.constant 0.000000e+00 : f32
      %24 = vector.broadcast %cst_12 : f32 to vector<1x128xf32>
      %c0_13 = arith.constant 0 : index
      %c0_14 = arith.constant 0 : index
      %25 = vector.load %arg6[%c0_13, %c0_14] : memref<1x128xf32, #tpu.memory_space<vmem>>, vector<1x128xf32>
      tpu.vector_store %arg6[%c0_13, %c0_14], %24 {strides = array<i32>} : memref<1x128xf32, #tpu.memory_space<vmem>>, vector<1x128xf32>,
    } else {
    }
    %c0_i32_1 = arith.constant 0 : i32
    %3 = arith.cmpi eq, %arg1, %c0_i32_1 : i32
    %c0_i32_2 = arith.constant 0 : i32
    %4 = arith.cmpi eq, %arg0, %c0_i32_2 : i32
    %5 = arith.andi %3, %4 : i1
    %6 = arith.extui %5 : i1 to i32
    %c0_i32_3 = arith.constant 0 : i32
    %7 = arith.cmpi ne, %6, %c0_i32_3 : i32
    scf.if %7 {
      %c0_10 = arith.constant 0 : index
      %c0_11 = arith.constant 0 : index
      %22 = vector.load %arg2[%c0_10, %c0_11] : memref<1x128xf32, #tpu.memory_space<vmem>>, vector<1x128xf32>
      %23 = tpu.iota {dimensions = array<i32: 0>} : vector<1x128xi32>
      %c128_i32_12 = arith.constant 128 : i32
      %24 = vector.broadcast %c128_i32_12 : i32 to vector<1x128xi32>
      %25 = arith.muli %23, %24 : vector<1x128xi32>
      %26 = tpu.iota {dimensions = array<i32: 1>} : vector<1x128xi32>
      %27 = arith.addi %25, %26 : vector<1x128xi32>
      %c8_i32 = arith.constant 8 : i32
      %28 = vector.broadcast %c8_i32 : i32 to vector<1x128xi32>
      %29 = arith.cmpi slt, %27, %28 : vector<1x128xi32>
      %cst = arith.constant 1.000000e+00 : f32
      %30 = vector.broadcast %cst : f32 to vector<1x128xf32>
      %31 = arith.select %29, %22, %30 : vector<1x128xi1>, vector<1x128xf32>
      %cst_13 = arith.constant 1.000000e-07 : f32
      %32 = vector.broadcast %cst_13 : f32 to vector<1x128xf32>
      %33 = arith.addf %31, %32 : vector<1x128xf32>
      %34 = math.log %33 : vector<1x128xf32>
      %cst_14 = arith.constant 0.000000e+00 : f32
      %35 = vector.broadcast %cst_14 : f32 to vector<1x128xf32>
      %36 = arith.select %29, %34, %35 : vector<1x128xi1>, vector<1x128xf32>
      %cst_15 = arith.constant dense<0.000000e+00> : vector<128xf32>
      %37 = vector.multi_reduction <add>, %36, %cst_15 [0] : vector<1x128xf32> to vector<128xf32>
      %38 = vector.shape_cast %37 : vector<128xf32> to vector<1x128xf32>
      %c0_16 = arith.constant 0 : index
      %c0_17 = arith.constant 0 : index
      %39 = vector.load %arg5[%c0_16, %c0_17] : memref<1x128xf32, #tpu.memory_space<vmem>>, vector<1x128xf32>
      tpu.vector_store %arg5[%c0_16, %c0_17], %38 {strides = array<i32>} : memref<1x128xf32, #tpu.memory_space<vmem>>, vector<1x128xf32>,
    } else {
    }
    %c0 = arith.constant 0 : index
    %c0_4 = arith.constant 0 : index
    %8 = vector.load %arg3[%c0, %c0_4] : memref<1x128xf32, #tpu.memory_space<vmem>>, vector<1x128xf32>
    %c1_i32 = arith.constant 1 : i32
    %9 = arith.muli %arg0, %c1_i32 : i32
    %10 = arith.addi %9, %arg1 : i32
    %c128_i32 = arith.constant 128 : i32
    %11 = arith.muli %10, %c128_i32 : i32
    %c128_i32_5 = arith.constant 128 : i32
    %12 = arith.addi %11, %c128_i32_5 : i32
    %c32_i32 = arith.constant 32 : i32
    %13 = arith.cmpi sle, %12, %c32_i32 : i32
    %14 = arith.extui %13 : i1 to i32
    %c0_i32_6 = arith.constant 0 : i32
    %15 = arith.cmpi ne, %14, %c0_i32_6 : i32
    scf.if %15 {
      %cst = arith.constant 1.000000e-07 : f32
      %22 = vector.broadcast %cst : f32 to vector<1x128xf32>
      %23 = arith.addf %8, %22 : vector<1x128xf32>
      %24 = math.log %23 : vector<1x128xf32>
      %c0_10 = arith.constant 0 : index
      %c0_11 = arith.constant 0 : index
      %25 = vector.load %arg6[%c0_10, %c0_11] : memref<1x128xf32, #tpu.memory_space<vmem>>, vector<1x128xf32>
      %cst_12 = arith.constant dense<0.000000e+00> : vector<128xf32>
      %26 = vector.multi_reduction <add>, %24, %cst_12 [0] : vector<1x128xf32> to vector<128xf32>
      %27 = vector.shape_cast %26 : vector<128xf32> to vector<1x128xf32>
      %28 = arith.addf %25, %27 : vector<1x128xf32>
      %c0_13 = arith.constant 0 : index
      %c0_14 = arith.constant 0 : index
      %29 = vector.load %arg6[%c0_13, %c0_14] : memref<1x128xf32, #tpu.memory_space<vmem>>, vector<1x128xf32>
      tpu.vector_store %arg6[%c0_13, %c0_14], %28 {strides = array<i32>} : memref<1x128xf32, #tpu.memory_space<vmem>>, vector<1x128xf32>,
    } else {
    }
    %true = arith.constant true
    %16 = arith.xori %13, %true : i1
    %17 = arith.extui %16 : i1 to i32
    %c0_i32_7 = arith.constant 0 : i32
    %18 = arith.cmpi ne, %17, %c0_i32_7 : i32
    scf.if %18 {
      %22 = tpu.iota {dimensions = array<i32: 0>} : vector<1x128xi32>
      %c128_i32_10 = arith.constant 128 : i32
      %23 = vector.broadcast %c128_i32_10 : i32 to vector<1x128xi32>
      %24 = arith.muli %22, %23 : vector<1x128xi32>
      %25 = vector.broadcast %11 : i32 to vector<1x128xi32>
      %26 = arith.addi %25, %24 : vector<1x128xi32>
      %27 = tpu.iota {dimensions = array<i32: 1>} : vector<1x128xi32>
      %28 = arith.addi %26, %27 : vector<1x128xi32>
      %c32_i32_11 = arith.constant 32 : i32
      %29 = vector.broadcast %c32_i32_11 : i32 to vector<1x128xi32>
      %30 = arith.cmpi slt, %28, %29 : vector<1x128xi32>
      %cst = arith.constant 1.000000e+00 : f32
      %31 = vector.broadcast %cst : f32 to vector<1x128xf32>
      %32 = arith.select %30, %8, %31 : vector<1x128xi1>, vector<1x128xf32>
      %cst_12 = arith.constant 1.000000e-07 : f32
      %33 = vector.broadcast %cst_12 : f32 to vector<1x128xf32>
      %34 = arith.addf %32, %33 : vector<1x128xf32>
      %35 = math.log %34 : vector<1x128xf32>
      %cst_13 = arith.constant 0.000000e+00 : f32
      %36 = vector.broadcast %cst_13 : f32 to vector<1x128xf32>
      %37 = arith.select %30, %35, %36 : vector<1x128xi1>, vector<1x128xf32>
      %c0_14 = arith.constant 0 : index
      %c0_15 = arith.constant 0 : index
      %38 = vector.load %arg6[%c0_14, %c0_15] : memref<1x128xf32, #tpu.memory_space<vmem>>, vector<1x128xf32>
      %cst_16 = arith.constant dense<0.000000e+00> : vector<128xf32>
      %39 = vector.multi_reduction <add>, %37, %cst_16 [0] : vector<1x128xf32> to vector<128xf32>
      %40 = vector.shape_cast %39 : vector<128xf32> to vector<1x128xf32>
      %41 = arith.addf %38, %40 : vector<1x128xf32>
      %c0_17 = arith.constant 0 : index
      %c0_18 = arith.constant 0 : index
      %42 = vector.load %arg6[%c0_17, %c0_18] : memref<1x128xf32, #tpu.memory_space<vmem>>, vector<1x128xf32>
      tpu.vector_store %arg6[%c0_17, %c0_18], %41 {strides = array<i32>} : memref<1x128xf32, #tpu.memory_space<vmem>>, vector<1x128xf32>,
    } else {
    }
    %c0_i32_8 = arith.constant 0 : i32
    %19 = arith.cmpi eq, %arg1, %c0_i32_8 : i32
    %20 = arith.extui %19 : i1 to i32
    %c0_i32_9 = arith.constant 0 : i32
    %21 = arith.cmpi ne, %20, %c0_i32_9 : i32
    scf.if %21 {
      %c0_10 = arith.constant 0 : index
      %c0_11 = arith.constant 0 : index
      %22 = vector.load %arg6[%c0_10, %c0_11] : memref<1x128xf32, #tpu.memory_space<vmem>>, vector<1x128xf32>
      %cst = arith.constant dense<0.000000e+00> : vector<128xf32>
      %23 = vector.multi_reduction <add>, %22, %cst [0] : vector<1x128xf32> to vector<128xf32>
      %24 = vector.shape_cast %23 : vector<128xf32> to vector<1x128xf32>
      %c0_12 = arith.constant 0 : index
      %c0_13 = arith.constant 0 : index
      %25 = vector.load %arg5[%c0_12, %c0_13] : memref<1x128xf32, #tpu.memory_space<vmem>>, vector<1x128xf32>
      %cst_14 = arith.constant 2.500000e-01 : f32
      %26 = vector.broadcast %cst_14 : f32 to vector<1x128xf32>
      %27 = arith.mulf %26, %24 : vector<1x128xf32>
      %28 = arith.addf %25, %27 : vector<1x128xf32>
      %c0_15 = arith.constant 0 : index
      %c0_16 = arith.constant 0 : index
      %c0_17 = arith.constant 0 : index
      %29 = vector.load %arg4[%c0_15, %c0_16, %c0_17] : memref<1x1x128xf32, #tpu.memory_space<vmem>>, vector<1x1x128xf32>
      %30 = vector.shape_cast %29 : vector<1x1x128xf32> to vector<1x128xf32>
      %31 = vector.shape_cast %28 : vector<1x128xf32> to vector<1x1x128xf32>
      tpu.vector_store %arg4[%c0_15, %c0_16, %c0_17], %31 {strides = array<i32>} : memref<1x1x128xf32, #tpu.memory_space<vmem>>, vector<1x1x128xf32>,
    } else {
    }
    return
  }
  func.func @transform_0(%arg0: i32, %arg1: i32) -> (i32, i32) {
    %c0_i32 = arith.constant 0 : i32
    %c0_i32_0 = arith.constant 0 : i32
    %c0_i32_1 = arith.constant 0 : i32
    return %c0_i32, %c0_i32_0 : i32, i32
  }
  func.func @transform_1(%arg0: i32, %arg1: i32) -> (i32, i32) {
    %c1_i32 = arith.constant 1 : i32
    %0 = arith.muli %arg0, %c1_i32 : i32
    %1 = arith.addi %0, %arg1 : i32
    %c0_i32 = arith.constant 0 : i32
    %2 = arith.minsi %1, %c0_i32 : i32
    %c0_i32_0 = arith.constant 0 : i32
    %c0_i32_1 = arith.constant 0 : i32
    return %2, %c0_i32_0 : i32, i32
  }
  func.func @transform_2(%arg0: i32, %arg1: i32) -> (i32, i32, i32) {
    %c0_i32 = arith.constant 0 : i32
    %c0_i32_0 = arith.constant 0 : i32
    %c0_i32_1 = arith.constant 0 : i32
    return %arg0, %c0_i32, %c0_i32_0 : i32, i32, i32
  }
}

</mosaic_0001>

<llo_original>
// kernel: tpu_custom_call.1
$region0: #{tpu_custom_call.1}
  #allocation0 [shape = 'u32[]', space=smem, size = 0x4, offset = 0x4, fixed_abs, tag = 'smem constant byte address 0x4 - core index']
  #allocation1 [shape = 'u32[72,128]{1,0:T(1,128)}', space=vmem, size = 0x9000, scoped, tag = 'internal scratch']
  #allocation2 [shape = 'f32[1,128]{1,0:T(1,128)}', space=vmem, size = 0x200, scoped, tag = 'scratch operand']
  #allocation3 [shape = 'f32[1,128]{1,0:T(1,128)}', space=vmem, size = 0x200, scoped, tag = 'scratch operand']
  %s0 = inlined_call_operand.hbm [shape: f32[1,128], index: 0, kind: input, shape index: {}]
  %s1 = inlined_call_operand.hbm [shape: f32[1,128], index: 1, kind: input, shape index: {}]
  %s2 = inlined_call_operand.hbm [shape: f32[1,1,128], index: 2, kind: output, shape index: {}]
  %s3 = sld [smem:[#allocation0]]
  $region46: #{tpu_custom_call.1} parent=0
    _
  %s5 = ssub.s32 1, %s3
  %s6 = scalar_select 0, %s5, %s3
  $region1: #{tpu_custom_call.1} parent=0
    #allocation4 [shape = 'u8[512]{0}', space=vmem, size = 0x400, scoped, tag = 'input window, operand 0, single buffered']
    #allocation5 [shape = 's32[1]{0}', space=sflag, size = 0x4, scoped, tag = 'scoped memory for tpu_custom_call.1']
    #allocation6 [shape = 's32[1]{0}', space=sflag, size = 0x4, scoped, tag = 'scoped memory for tpu_custom_call.1']
    #allocation7 [shape = 'u8[512]{0}', space=vmem, size = 0x400, scoped, tag = 'input window, operand 1, single buffered']
    #allocation8 [shape = 's32[1]{0}', space=sflag, size = 0x4, scoped, tag = 'scoped memory for tpu_custom_call.1']
    #allocation9 [shape = 'u8[512]{0}', space=vmem, size = 0x400, scoped, tag = 'output window, operand 0, single buffered']
    %7 = vsyncpa [#allocation5], 0
    %8 = vsyncpa [#allocation8], 0
    %9 = vsyncpa [#allocation6], 0
    // Predicated region
    $region2: #{tpu_custom_call.1} parent=1 // pred_check
      _
    $region3: #{tpu_custom_call.1} parent=1 // pred_check_branch
      %11 = sbr.rel (0) target = $region5
    $region4: #{tpu_custom_call.1} parent=1 // pred_region
      %13 = vsyncadd [#allocation5], 0
      %s15 = sshll.u32 %s0, 4
      %s16 = int_to_ptr.hbm [resolvable:$true] %s15
      %s17 = sshll.u32 [#allocation4], 4
      %s18 = int_to_ptr.vmem [resolvable:$true] %s17
      %20 = dma.hbm_to_vmem [thread:$0]  %s16, 16, %s18, [#allocation5]
    $region5: #{tpu_custom_call.1} parent=1 // pred_fallthru
      _
    // Predicated region
    $region6: #{tpu_custom_call.1} parent=1 // pred_check
      _
    $region7: #{tpu_custom_call.1} parent=1 // pred_check_branch
      %22 = sbr.rel (0) target = $region9
    $region8: #{tpu_custom_call.1} parent=1 // pred_region
      %s23 = sadd.s32 0, 0
      %p24 = scmp.lt.s32.totalorder %s23, 0
      %s25 = scalar_select %p24, %s23, 0
      %27 = vsyncadd [#allocation8], 0
      %s28 = scalar_lea.hbm %s1, %s25
      %s30 = sshll.u32 %s28, 4
      %s31 = int_to_ptr.hbm [resolvable:$true] %s30
      %s32 = sshll.u32 [#allocation7], 4
      %s33 = int_to_ptr.vmem [resolvable:$true] %s32
      %35 = dma.hbm_to_vmem [thread:$0]  %s31, 16, %s33, [#allocation8]
    $region9: #{tpu_custom_call.1} parent=1 // pred_fallthru
      _
    // Predicated region
    $region10: #{tpu_custom_call.1} parent=1 // pred_check
      _
    $region11: #{tpu_custom_call.1} parent=1 // pred_check_branch
      %37 = sbr.rel (0) target = $region13
    $region12: #{tpu_custom_call.1} parent=1 // pred_region
      %39 = dma.done [#allocation5], 16
    $region13: #{tpu_custom_call.1} parent=1 // pred_fallthru
      _
    // Predicated region
    $region14: #{tpu_custom_call.1} parent=1 // pred_check
      _
    $region15: #{tpu_custom_call.1} parent=1 // pred_check_branch
      %41 = sbr.rel (0) target = $region17
    $region16: #{tpu_custom_call.1} parent=1 // pred_region
      %43 = dma.done [#allocation8], 16
    $region17: #{tpu_custom_call.1} parent=1 // pred_fallthru
      _
    %s44 = sadd.s32 0, 0
    %p45 = scmp.lt.s32.totalorder %s44, 0
    %s46 = scalar_select %p45, %s44, 0
    %p47 = scmp.eq.s32.totalorder 0, 0
    // Predicated region
    $region18: #{tpu_custom_call.1} parent=1 // pred_check
      %p48 = pneg %p47
    $region19: #{tpu_custom_call.1} parent=1 // pred_check_branch
      %50 = sbr.rel (%p48) target = $region21
    $region20: #{tpu_custom_call.1} parent=1 // pred_region
      %51 = vst [vmem:[#allocation2] sm:$0x1] 0.0
      %52 = vst [vmem:[#allocation3] sm:$0x1] 0.0
    $region21: #{tpu_custom_call.1} parent=1 // pred_fallthru
      _
    %p53 = scmp.eq.s32.totalorder 0, 0
    %p54 = pnand %p47, %p53
    %p55 = pneg %p54
    // Predicated region
    $region22: #{tpu_custom_call.1} parent=1 // pred_check
      _
    $region23: #{tpu_custom_call.1} parent=1 // pred_check_branch
      %57 = sbr.rel (%p54) target = $region25
    $region24: #{tpu_custom_call.1} parent=1 // pred_region
      %v58 = vld [vmem:[#allocation4] sm:$0x1]
      %v59 = vlaneseq
      %v60 = vshrl.u32 %v59, 7
      %v61 = vmul.u32 %v60, 128
      %v62 = vlaneseq
      %v63 = vand.u32 %v62, 127
      %v64 = vadd.s32 %v61, %v63
      %vm65 = vcmp.lt.s32.totalorder %v64, 8
      %v66 = vsel %vm65, %v58, 1.0
      %v67 = vadd.f32 %v66, 1e-07
      %v68 = vlog2.pop %v67
      %v69 = vmul.f32 %v68, 0.6931472
      %v70 = vsel %vm65, %v69, 0.0
      %v71 = vadd.f32 %v70, 0.0
      %72 = vst [vmem:[#allocation2] sm:$0x1] %v71
    $region25: #{tpu_custom_call.1} parent=1 // pred_fallthru
      _
    %v73 = vld [vmem:[#allocation7] sm:$0x1]
    %s74 = sadd.s32 0, 0
    %s75 = smul.u32 %s74, 128
    %s76 = sadd.s32 %s75, 128
    %p77 = scmp.le.s32.totalorder %s76, 32
    // Predicated region
    $region26: #{tpu_custom_call.1} parent=1 // pred_check
      %p78 = pneg %p77
    $region27: #{tpu_custom_call.1} parent=1 // pred_check_branch
      %80 = sbr.rel (%p78) target = $region29
    $region28: #{tpu_custom_call.1} parent=1 // pred_region
      %v81 = vadd.f32 %v73, 1e-07
      %v82 = vlog2.pop %v81
      %v83 = vmul.f32 %v82, 0.6931472
      %v84 = vld [vmem:[#allocation3] sm:$0x1]
      %v85 = vadd.f32 %v83, 0.0
      %v86 = vadd.f32 %v84, %v85
      %87 = vst [vmem:[#allocation3] sm:$0x1] %v86
    $region29: #{tpu_custom_call.1} parent=1 // pred_fallthru
      _
    %p88 = scmp.gt.s32.totalorder %s76, 32
    // Predicated region
    $region30: #{tpu_custom_call.1} parent=1 // pred_check
      %p89 = pneg %p88
    $region31: #{tpu_custom_call.1} parent=1 // pred_check_branch
      %91 = sbr.rel (%p89) target = $region33
    $region32: #{tpu_custom_call.1} parent=1 // pred_region
      %v92 = vlaneseq
      %v93 = vshrl.u32 %v92, 7
      %v94 = vmul.u32 %v93, 128
      %v95 = vstv %s75
      %v96 = vadd.s32 %v95, %v94
      %v97 = vlaneseq
      %v98 = vand.u32 %v97, 127
      %v99 = vadd.s32 %v96, %v98
      %vm100 = vcmp.lt.s32.totalorder %v99, 32
      %v101 = vsel %vm100, %v73, 1.0
      %v102 = vadd.f32 %v101, 1e-07
      %v103 = vlog2.pop %v102
      %v104 = vmul.f32 %v103, 0.6931472
      %v105 = vsel %vm100, %v104, 0.0
      %v106 = vld [vmem:[#allocation3] sm:$0x1]
      %v107 = vadd.f32 %v105, 0.0
      %v108 = vadd.f32 %v106, %v107
      %109 = vst [vmem:[#allocation3] sm:$0x1] %v108
    $region33: #{tpu_custom_call.1} parent=1 // pred_fallthru
      _
    // Predicated region
    $region34: #{tpu_custom_call.1} parent=1 // pred_check
      %p110 = pneg %p47
    $region35: #{tpu_custom_call.1} parent=1 // pred_check_branch
      %112 = sbr.rel (%p110) target = $region37
    $region36: #{tpu_custom_call.1} parent=1 // pred_region
      %v113 = vld [vmem:[#allocation3] sm:$0x1]
      %v114 = vadd.f32 %v113, 0.0
      %v115 = vld [vmem:[#allocation2] sm:$0x1]
      %v116 = vmul.f32 %v114, 0.25
      %v117 = vadd.f32 %v115, %v116
      %118 = vst [vmem:[#allocation9] sm:$0x1] %v117
    $region37: #{tpu_custom_call.1} parent=1 // pred_fallthru
      _
    // Predicated region
    $region38: #{tpu_custom_call.1} parent=1 // pred_check
      _
    $region39: #{tpu_custom_call.1} parent=1 // pred_check_branch
      %120 = sbr.rel (0) target = $region41
    $region40: #{tpu_custom_call.1} parent=1 // pred_region
      %122 = vsyncadd [#allocation6], 0
      %s124 = sshll.u32 [#allocation9], 4
      %s125 = int_to_ptr.vmem [resolvable:$true] %s124
      %s126 = sshll.u32 %s2, 4
      %s127 = int_to_ptr.hbm [resolvable:$true] %s126
      %129 = dma.vmem_to_hbm [thread:$0]  %s125, 16, %s127, [#allocation6]
    $region41: #{tpu_custom_call.1} parent=1 // pred_fallthru
      _
    // Predicated region
    $region42: #{tpu_custom_call.1} parent=1 // pred_check
      _
    $region43: #{tpu_custom_call.1} parent=1 // pred_check_branch
      %131 = sbr.rel (0) target = $region45
    $region44: #{tpu_custom_call.1} parent=1 // pred_region
      %133 = dma.done [#allocation6], 16
    $region45: #{tpu_custom_call.1} parent=1 // pred_fallthru
      _
    %134 = vsyncpa [#allocation5], 1
    %135 = vsyncpa [#allocation8], 1
    %136 = vsyncpa [#allocation6], 1

</llo_original>
